<compile_context>
chip_gen: v7x
topology: tpu7x:2x2x1
jax: 0.10.0
libtpu: 0.0.40
codegen_flags: <defaults>
</compile_context>

<pallas_src>
import jax
import jax.numpy as jnp
from jax.experimental import pallas as pl
from jax.experimental.pallas import tpu as pltpu

N_QUBITS = 2
N_LAYERS = 2
LANES = 128
SUBLANES = 8


# ----------------------------------------------------------------------------
# Plain-JAX parameter setup: fixed 4x4 unitary of StronglyEntanglingLayers
# ----------------------------------------------------------------------------
def _rot(phi, theta, omega):
    """PennyLane Rot gate = RZ(omega) RY(theta) RZ(phi), 2x2 complex."""
    c = jnp.cos(theta / 2.0)
    s = jnp.sin(theta / 2.0)
    return jnp.array(
        [
            [jnp.exp(-0.5j * (phi + omega)) * c, -jnp.exp(0.5j * (phi - omega)) * s],
            [jnp.exp(0.5j * (phi - omega)) * s, jnp.exp(0.5j * (phi + omega)) * c],
        ],
        dtype=jnp.complex64,
    )


def strongly_entangling_unitary(weights):
    """4x4 unitary for StronglyEntanglingLayers on 2 qubits (ranges = 1)."""
    # basis ordering |q0 q1> with wire 0 as most-significant bit (PennyLane).
    cnot01 = jnp.array(
        [[1, 0, 0, 0], [0, 1, 0, 0], [0, 0, 0, 1], [0, 0, 1, 0]], dtype=jnp.complex64
    )
    cnot10 = jnp.array(
        [[1, 0, 0, 0], [0, 0, 0, 1], [0, 0, 1, 0], [0, 1, 0, 0]], dtype=jnp.complex64
    )
    u = jnp.eye(4, dtype=jnp.complex64)
    for l in range(weights.shape[0]):
        r0 = _rot(weights[l, 0, 0], weights[l, 0, 1], weights[l, 0, 2])
        r1 = _rot(weights[l, 1, 0], weights[l, 1, 1], weights[l, 1, 2])
        layer = cnot10 @ cnot01 @ jnp.kron(r0, r1)
        u = layer @ u
    return u


def _rx(a):
    c = jnp.cos(a / 2.0)
    s = jnp.sin(a / 2.0)
    return jnp.array([[c, -1j * s], [-1j * s, c]], dtype=jnp.complex64)


def reference_forward(x, u, fc_w, fc_b):
    """Pure-JAX reference (independent statevector simulation) for validation."""

    def one(xi):
        e0 = jnp.zeros((4,), jnp.complex64).at[0].set(1.0)
        psi = u @ (jnp.kron(_rx(xi[0]), _rx(xi[1])) @ e0)
        probs = jnp.abs(psi) ** 2
        expz = probs[0] + probs[1] - probs[2] - probs[3]
        z = expz * fc_w[0, 0] + fc_b[0]
        return 1.0 / (1.0 + jnp.exp(-z))

    return jax.vmap(one)(x)[:, None]


# ----------------------------------------------------------------------------
# Host-side folding of circuit + Linear(1,1) into 9 scalar coefficients.
#
# Embedded state (RX(x0) (x) RX(x1)) |00> = [a, -i*c, -i*d, -b] with
#   a = cos(x0/2)cos(x1/2), b = sin(x0/2)sin(x1/2),
#   c = cos(x0/2)sin(x1/2), d = sin(x0/2)cos(x1/2).
# <Z0> = w^T Q w  (w = (a,b,c,d), Q symmetric, built from U) which, via
# half-angle identities, is affine in {1, C0, S0, C1, S1, C0C1, C0S1, S0C1,
# S0S1} with Ci = cos(xi), Si = sin(xi).  The fc weight/bias are folded in.
# ----------------------------------------------------------------------------
def fold_params(u, fc_w, fc_b):
    ur = jnp.real(u).astype(jnp.float32)
    ui = jnp.imag(u).astype(jnp.float32)
    # psi_j = (R_j . w) + i (M_j . w)
    R = jnp.stack([ur[:, 0], -ur[:, 3], ui[:, 1], ui[:, 2]], axis=1)  # (4, 4)
    M = jnp.stack([ui[:, 0], -ui[:, 3], -ur[:, 1], -ur[:, 2]], axis=1)  # (4, 4)
    sign = jnp.array([1.0, 1.0, -1.0, -1.0], jnp.float32)  # <Z0> signs per basis
    Q = jnp.einsum("j,ja,jb->ab", sign, R, R) + jnp.einsum("j,ja,jb->ab", sign, M, M)

    k_const = (Q[0, 0] + Q[1, 1] + Q[2, 2] + Q[3, 3]) / 4.0
    k_c0 = (Q[0, 0] - Q[1, 1] + Q[2, 2] - Q[3, 3]) / 4.0
    k_c1 = (Q[0, 0] - Q[1, 1] - Q[2, 2] + Q[3, 3]) / 4.0
    k_c0c1 = (Q[0, 0] + Q[1, 1] - Q[2, 2] - Q[3, 3]) / 4.0
    k_s0 = (Q[0, 3] + Q[1, 2]) / 2.0
    k_s1 = (Q[0, 2] + Q[1, 3]) / 2.0
    k_s0s1 = (Q[0, 1] + Q[2, 3]) / 2.0
    k_c0s1 = (Q[0, 2] - Q[1, 3]) / 2.0
    k_s0c1 = (Q[0, 3] - Q[1, 2]) / 2.0

    w = jnp.asarray(fc_w, jnp.float32).reshape(())
    b = jnp.asarray(fc_b, jnp.float32).reshape(())
    # Ordering consumed by the kernel:
    # [const, C0, S0, C1, S1, C0C1, C0S1, S0C1, S0S1]
    return jnp.stack(
        [
            w * k_const + b,
            w * k_c0,
            w * k_s0,
            w * k_c1,
            w * k_s1,
            w * k_c0c1,
            w * k_c0s1,
            w * k_s0c1,
            w * k_s0s1,
        ]
    )  # (9,) f32 -> SMEM via scalar prefetch


# ----------------------------------------------------------------------------
# Pallas kernel: 4 trig + 9-coefficient bilinear form + sigmoid, all on
# sublane/lane-dense (TR, 128) tiles.  k_ref lives in SMEM (scalar prefetch).
# ----------------------------------------------------------------------------
def hybrid_qnn_kernel(k_ref, x_ref, o_ref):
    # x_ref: (2, TR, 128) angles (channel-major); o_ref: (TR, 128).
    x0 = x_ref[0]
    x1 = x_ref[1]
    c0 = jnp.cos(x0)
    s0 = jnp.sin(x0)
    c1 = jnp.cos(x1)
    s1 = jnp.sin(x1)
    t_const = k_ref[0] + k_ref[3] * c1 + k_ref[4] * s1
    t_c0 = k_ref[1] + k_ref[5] * c1 + k_ref[6] * s1
    t_s0 = k_ref[2] + k_ref[7] * c1 + k_ref[8] * s1
    z = t_const + c0 * t_c0 + s0 * t_s0
    # sigmoid(z) = 0.5*(1 + tanh(z/2)): tanh goes to the EUP slot, no f32
    # divide on the binding VALU slot.
    o_ref[...] = 0.5 + 0.5 * jnp.tanh(0.5 * z)


def hybrid_qnn(x, u, fc_w, fc_b, *, max_tr=256, min_tiles=2):
    """Forward pass matching torch.sigmoid(fc(quantum_layer(x))).

    x: (B, 2) float32 angles.  Returns (B, 1) float32.
    """
    B = x.shape[0]

    # --- batch tiling: rows of 128 lanes, TR rows (multiple of 8) per block.
    nr = max(pl.cdiv(B, LANES), 1)
    tr = max_tr
    # Shrink the tile (in power-of-two steps, staying a multiple of 8) until
    # the parallel grid axis has at least `min_tiles` steps (v7x: 2 TCs) —
    # unless the whole batch is smaller than one minimal tile.
    while tr > SUBLANES and pl.cdiv(nr, tr) < min_tiles:
        tr //= 2
    n_tiles = pl.cdiv(nr, tr)
    NR = n_tiles * tr
    Bp = NR * LANES

    # One fused pad + reshape + transpose:
    # (B, 2) -> (Bp, 2) -> (NR, 128, 2) -> (2, NR, 128)  (channel-major,
    # sublane/lane-dense).  Padded tail samples get angle 0; they produce a
    # finite value and are sliced off below.
    x = jnp.asarray(x, jnp.float32)
    xt = jnp.pad(x, ((0, Bp - B), (0, 0))).reshape(NR, LANES, 2).transpose(2, 0, 1)

    params = fold_params(u, fc_w, fc_b)  # (9,) SMEM scalars

    out = pl.pallas_call(
        hybrid_qnn_kernel,
        out_shape=jax.ShapeDtypeStruct((NR, LANES), jnp.float32),
        grid_spec=pltpu.PrefetchScalarGridSpec(
            num_scalar_prefetch=1,
            grid=(n_tiles,),
            in_specs=[pl.BlockSpec((2, tr, LANES), lambda i, k: (0, i, 0))],
            out_specs=pl.BlockSpec((tr, LANES), lambda i, k: (i, 0)),
        ),
        compiler_params=pltpu.CompilerParams(
            dimension_semantics=("parallel",)
        ),
    )(params, xt)

    return out.reshape(-1)[:B][:, None]  # (B, 1)


if __name__ == "__main__":
    key = jax.random.PRNGKey(0)
    k_x, k_qw, k_w, k_b, k_x2 = jax.random.split(key, 5)

    # TorchLayer default init for StronglyEntanglingLayers: U(0, 2*pi)
    q_weights = jax.random.uniform(
        k_qw, (N_LAYERS, N_QUBITS, 3), jnp.float32, minval=0.0, maxval=2.0 * jnp.pi
    )
    # nn.Linear(1, 1): weight (1,1), bias (1,)
    fc_w = jax.random.uniform(k_w, (1, 1), jnp.float32, minval=-1.0, maxval=1.0)
    fc_b = jax.random.uniform(k_b, (1,), jnp.float32, minval=-1.0, maxval=1.0)

    u = strongly_entangling_unitary(q_weights)

    # Small batch (module-scale test; single tile, padded).
    B = 8
    x = jax.random.uniform(
        k_x, (B, N_QUBITS), jnp.float32, minval=-jnp.pi, maxval=jnp.pi
    )
    out = jax.block_until_ready(hybrid_qnn(x, u, fc_w, fc_b))
    ref = reference_forward(x, u, fc_w, fc_b)
    assert out.shape == (B, 1)
    assert jnp.allclose(out, ref, atol=1e-5, rtol=1e-5), (out, ref)

    # Multi-tile / ragged-batch path (exercises the parallel batch grid).
    B2 = 2000
    x2 = jax.random.uniform(
        k_x2, (B2, N_QUBITS), jnp.float32, minval=-jnp.pi, maxval=jnp.pi
    )
    out2 = jax.block_until_ready(hybrid_qnn(x2, u, fc_w, fc_b, max_tr=8))
    ref2 = reference_forward(x2, u, fc_w, fc_b)
    assert out2.shape == (B2, 1)
    assert jnp.allclose(out2, ref2, atol=1e-5, rtol=1e-5)

    print("KERNEL_OK")
</pallas_src>

<mosaic_0001>
module attributes {stable_mosaic.version = 11 : i64} {
  func.func @hybrid_qnn_kernel(%arg0: i32, %arg1: memref<9xf32, #tpu.memory_space<smem>>, %arg2: memref<2x8x128xf32, #tpu.memory_space<vmem>>, %arg3: memref<8x128xf32, #tpu.memory_space<vmem>>) attributes {dimension_semantics = [#tpu.dimension_semantics<parallel>], iteration_bounds = array<i64: 1>, scalar_prefetch = 1 : i64, scratch_operands = 0 : i64, tpu.core_type = #tpu.core_type<tc>, window_params = [{transform_indices = @transform_0, window_bounds = array<i64: 2, 8, 128>}, {transform_indices = @transform_1, window_bounds = array<i64: 8, 128>}]} {
    %c0 = arith.constant 0 : index
    %c0_0 = arith.constant 0 : index
    %c0_1 = arith.constant 0 : index
    %0 = vector.load %arg2[%c0, %c0_0, %c0_1] : memref<2x8x128xf32, #tpu.memory_space<vmem>>, vector<1x8x128xf32>
    %1 = vector.shape_cast %0 : vector<1x8x128xf32> to vector<8x128xf32>
    %c1 = arith.constant 1 : index
    %c0_2 = arith.constant 0 : index
    %c0_3 = arith.constant 0 : index
    %2 = vector.load %arg2[%c1, %c0_2, %c0_3] : memref<2x8x128xf32, #tpu.memory_space<vmem>>, vector<1x8x128xf32>
    %3 = vector.shape_cast %2 : vector<1x8x128xf32> to vector<8x128xf32>
    %4 = math.cos %1 : vector<8x128xf32>
    %5 = math.sin %1 : vector<8x128xf32>
    %6 = math.cos %3 : vector<8x128xf32>
    %7 = math.sin %3 : vector<8x128xf32>
    %c0_4 = arith.constant 0 : index
    %8 = memref.load %arg1[%c0_4] : memref<9xf32, #tpu.memory_space<smem>>
    %c3 = arith.constant 3 : index
    %9 = memref.load %arg1[%c3] : memref<9xf32, #tpu.memory_space<smem>>
    %10 = vector.broadcast %9 : f32 to vector<8x128xf32>
    %11 = arith.mulf %10, %6 : vector<8x128xf32>
    %12 = vector.broadcast %8 : f32 to vector<8x128xf32>
    %13 = arith.addf %12, %11 : vector<8x128xf32>
    %c4 = arith.constant 4 : index
    %14 = memref.load %arg1[%c4] : memref<9xf32, #tpu.memory_space<smem>>
    %15 = vector.broadcast %14 : f32 to vector<8x128xf32>
    %16 = arith.mulf %15, %7 : vector<8x128xf32>
    %17 = arith.addf %13, %16 : vector<8x128xf32>
    %c1_5 = arith.constant 1 : index
    %18 = memref.load %arg1[%c1_5] : memref<9xf32, #tpu.memory_space<smem>>
    %c5 = arith.constant 5 : index
    %19 = memref.load %arg1[%c5] : memref<9xf32, #tpu.memory_space<smem>>
    %20 = vector.broadcast %19 : f32 to vector<8x128xf32>
    %21 = arith.mulf %20, %6 : vector<8x128xf32>
    %22 = vector.broadcast %18 : f32 to vector<8x128xf32>
    %23 = arith.addf %22, %21 : vector<8x128xf32>
    %c6 = arith.constant 6 : index
    %24 = memref.load %arg1[%c6] : memref<9xf32, #tpu.memory_space<smem>>
    %25 = vector.broadcast %24 : f32 to vector<8x128xf32>
    %26 = arith.mulf %25, %7 : vector<8x128xf32>
    %27 = arith.addf %23, %26 : vector<8x128xf32>
    %c2 = arith.constant 2 : index
    %28 = memref.load %arg1[%c2] : memref<9xf32, #tpu.memory_space<smem>>
    %c7 = arith.constant 7 : index
    %29 = memref.load %arg1[%c7] : memref<9xf32, #tpu.memory_space<smem>>
    %30 = vector.broadcast %29 : f32 to vector<8x128xf32>
    %31 = arith.mulf %30, %6 : vector<8x128xf32>
    %32 = vector.broadcast %28 : f32 to vector<8x128xf32>
    %33 = arith.addf %32, %31 : vector<8x128xf32>
    %c8 = arith.constant 8 : index
    %34 = memref.load %arg1[%c8] : memref<9xf32, #tpu.memory_space<smem>>
    %35 = vector.broadcast %34 : f32 to vector<8x128xf32>
    %36 = arith.mulf %35, %7 : vector<8x128xf32>
    %37 = arith.addf %33, %36 : vector<8x128xf32>
    %38 = arith.mulf %4, %27 : vector<8x128xf32>
    %39 = arith.addf %17, %38 : vector<8x128xf32>
    %40 = arith.mulf %5, %37 : vector<8x128xf32>
    %41 = arith.addf %39, %40 : vector<8x128xf32>
    %cst = arith.constant 5.000000e-01 : f32
    %42 = vector.broadcast %cst : f32 to vector<8x128xf32>
    %43 = arith.mulf %42, %41 : vector<8x128xf32>
    %44 = math.tanh %43 : vector<8x128xf32>
    %cst_6 = arith.constant 5.000000e-01 : f32
    %45 = vector.broadcast %cst_6 : f32 to vector<8x128xf32>
    %46 = arith.mulf %45, %44 : vector<8x128xf32>
    %cst_7 = arith.constant 5.000000e-01 : f32
    %47 = vector.broadcast %cst_7 : f32 to vector<8x128xf32>
    %48 = arith.addf %47, %46 : vector<8x128xf32>
    %c0_8 = arith.constant 0 : index
    %c0_9 = arith.constant 0 : index
    %49 = vector.load %arg3[%c0_8, %c0_9] : memref<8x128xf32, #tpu.memory_space<vmem>>, vector<8x128xf32>
    tpu.vector_store %arg3[%c0_8, %c0_9], %48 {strides = array<i32>} : memref<8x128xf32, #tpu.memory_space<vmem>>, vector<8x128xf32>,
    return
  }
  func.func @transform_0(%arg0: i32, %arg1: memref<9xf32, #tpu.memory_space<smem>>) -> (i32, i32, i32) {
    %c0_i32 = arith.constant 0 : i32
    %c0_i32_0 = arith.constant 0 : i32
    %c0_i32_1 = arith.constant 0 : i32
    return %c0_i32, %arg0, %c0_i32_0 : i32, i32, i32
  }
  func.func @transform_1(%arg0: i32, %arg1: memref<9xf32, #tpu.memory_space<smem>>) -> (i32, i32) {
    %c0_i32 = arith.constant 0 : i32
    %c0_i32_0 = arith.constant 0 : i32
    return %arg0, %c0_i32 : i32, i32
  }
}

</mosaic_0001>

<llo_original>
// kernel: tpu_custom_call.1
$region0: #{tpu_custom_call.1}
  #allocation0 [shape = 'u32[]', space=smem, size = 0x4, offset = 0x4, fixed_abs, tag = 'smem constant byte address 0x4 - core index']
  #allocation1 [shape = 'u32[144,128]{1,0:T(1,128)}', space=vmem, size = 0x12000, scoped, tag = 'internal scratch']
  #allocation2 [shape = 's32[1]{0}', space=sflag, size = 0x4, scoped, tag = 'scoped memory for tpu_custom_call.1']
  #allocation3 [shape = 'u8[512]{0}', space=smem, size = 0x200, scoped, tag = 'prefetched SMEM operand 0']
  %s0 = inlined_call_operand.hbm [shape: f32[9], index: 0, kind: input, shape index: {}]
  %s1 = inlined_call_operand.hbm [shape: f32[2,8,128], index: 1, kind: input, shape index: {}]
  %s2 = inlined_call_operand.hbm [shape: f32[8,128], index: 2, kind: output, shape index: {}]
  %s3 = sld [smem:[#allocation0]]
  $region18: #{tpu_custom_call.1} parent=0
    _
  %s5 = ssub.s32 1, %s3
  %s6 = scalar_select 0, %s5, %s3
  %8 = dma.hbm_to_smem %s0, 16, [#allocation3], [#allocation2]
  %9 = dma.done [#allocation2], 16
  %10 = sfence
  $region1: #{tpu_custom_call.1} parent=0
    #allocation4 [shape = 'u8[8192]{0}', space=vmem, size = 0x2000, scoped, tag = 'input window, operand 1, single buffered']
    #allocation5 [shape = 's32[1]{0}', space=sflag, size = 0x4, scoped, tag = 'scoped memory for tpu_custom_call.1']
    #allocation6 [shape = 's32[1]{0}', space=sflag, size = 0x4, scoped, tag = 'scoped memory for tpu_custom_call.1']
    #allocation7 [shape = 'u8[4096]{0}', space=vmem, size = 0x1000, scoped, tag = 'output window, operand 0, single buffered']
    %11 = vsyncpa [#allocation5], 0
    %12 = vsyncpa [#allocation6], 0
    // Predicated region
    $region2: #{tpu_custom_call.1} parent=1 // pred_check
      _
    $region3: #{tpu_custom_call.1} parent=1 // pred_check_branch
      %14 = sbr.rel (0) target = $region5
    $region4: #{tpu_custom_call.1} parent=1 // pred_region
      %s16 = ssub.s32 256, 256
      %17 = vsyncadd [#allocation5], %s16
      %s18 = sshll.u32 [#allocation4], 4
      %s19 = int_to_ptr.vmem [resolvable:$true] %s18
      %24 = dma.hbm_to_vmem [thread:$0]  %s1, 256, %s19, [#allocation5], 128, 128, 8
    $region5: #{tpu_custom_call.1} parent=1 // pred_fallthru
      _
    // Predicated region
    $region6: #{tpu_custom_call.1} parent=1 // pred_check
      _
    $region7: #{tpu_custom_call.1} parent=1 // pred_check_branch
      %26 = sbr.rel (0) target = $region9
    $region8: #{tpu_custom_call.1} parent=1 // pred_region
      %27 = dma.done [#allocation5], 256
    $region9: #{tpu_custom_call.1} parent=1 // pred_fallthru
      _
    %v28 = vld [vmem:[#allocation4] sm:$0xff]
    %s29 = scalar_lea.vmem [#allocation4], 8
    %v30 = vld [vmem:[%s29] sm:$0xff]
    %v31 = vand.u32 2147483647, %v28
    %vm32 = vcmp.le.f32.partialorder %v31, 0.7853982
    %vm33 = vcmp.lt.s32.totalorder %v28, 0
    %v34 = vand.u32 %v28, 2139095040
    %v35 = vshrl.u32 %v34, 23
    %v36 = vsub.s32 %v35, 127
    %v37 = vand.u32 2147483647, %v28
    %v38 = vand.u32 %v37, 8388607
    %v39 = vor.u32 %v38, 8388608
    %v40 = vsub.s32 0, %v39
    %v41 = vadd.s32 %v36, 1
    %vm42 = vcmp.gt.s32.totalorder %v41, 0
    %v43 = vsel %vm42, %v41, 0
    %v44 = vshrl.u32 %v43, 5
    %v45 = vand.u32 %v43, 31
    %v46 = vsub.s32 32, %v45
    %v47 = vshrl.u32 683565275, %v46
    %v48 = vshll.u32 683565275, %v45
    %v49 = vshrl.u32 2475754826, %v46
    %v50 = vor.u32 %v48, %v49
    %v51 = vshll.u32 2475754826, %v45
    %v52 = vshrl.u32 2131351028, %v46
    %v53 = vor.u32 %v51, %v52
    %v54 = vshll.u32 2131351028, %v45
    %v55 = vshrl.u32 2102212464, %v46
    %v56 = vor.u32 %v54, %v55
    %v57 = vshll.u32 2102212464, %v45
    %v58 = vshrl.u32 920167782, %v46
    %v59 = vor.u32 %v57, %v58
    %v60 = vshll.u32 920167782, %v45
    %v61 = vshrl.u32 1326507024, %v46
    %v62 = vor.u32 %v60, %v61
    %vm63 = vcmp.lt.s32.totalorder %v44, 1
    %vm64 = vcmp.lt.s32.totalorder %v44, 2
    %vm65 = vcmp.lt.s32.totalorder %v44, 3
    %vm66 = vcmp.lt.s32.totalorder %v44, 4
    %v67 = vsel %vm63, %v47, %v50
    %v68 = vsel %vm66, %v56, 2102212464
    %v69 = vsel %vm65, %v53, %v68
    %v70 = vsel %vm64, %v67, %v69
    %v71 = vsel %vm63, %v50, %v53
    %v72 = vsel %vm66, %v59, 920167782
    %v73 = vsel %vm65, %v56, %v72
    %v74 = vsel %vm64, %v71, %v73
    %v75 = vsel %vm63, %v53, %v56
    %v76 = vsel %vm66, %v62, 1326507024
    %v77 = vsel %vm65, %v59, %v76
    %v78 = vsel %vm64, %v75, %v77
    %v79 = vshll.u32 %v39, 8
    %v80 = vmul.u32.u64.compose %v79, %v78
    %v81 = vextract.low.u32 %v80
    %v82 = vextract.high.u32 %v80
    %v83 = vmul.u32.u64.compose %v79, %v74
    %v84 = vextract.low.u32 %v83
    %v85 = vextract.high.u32 %v83
    %v86 = vmul.u32 %v79, %v70
    %v87 = vadd.s32 %v82, %v84
    %vm88 = vc.u32 %v82, %v84
    %v89 = vadd.s32 %v85, 1
    %v90 = vsel %vm88, %v89, %v85
    %v91 = vadd.s32 %v86, %v90
    %v92 = vadd.s32 %v91, 536870912
    %v93 = vshrl.u32 %v92, 30
    %v94 = vshll.u32 %v93, 30
    %v95 = vsub.s32 %v91, %v94
    %vm96 = vcmp.lt.s32.totalorder %v95, 0
    %v97 = vsub.s32 0, %v95
    %v98 = vsel %vm96, %v97, %v95
    %v99 = vclz %v98
    %v100 = vsub.s32 %v99, 2
    %vm101 = vcmp.gt.s32.totalorder 0, %v100
    %v102 = vsel %vm101, 0, %v100
    %v103 = vsub.s32 32, %v102
    %v104 = vshll.u32 %v95, %v102
    %v105 = vshrl.u32 %v87, %v103
    %v106 = vor.u32 %v104, %v105
    %v107 = vsub.s32 4294967266, %v102
    %v108 = vadd.s32 %v107, 127
    %v109 = vshll.u32 %v108, 23
    %v110 = vor.u32 4788187, %v109
    %v111 = vand.u32 2147483647, %v110
    %v113 = vcvt.s32.f32 %v106
    %v114 = vmul.f32 %v113, %v111
    %v115 = vxor.u32 %v114, 2147483648
    %v116 = vsel %vm33, %v115, %v114
    %v117 = vsub.s32 4, %v93
    %v118 = vsel %vm33, %v117, %v93
    %v119 = vsel %vm32, %v28, %v116
    %v120 = vsel %vm32, 0, %v118
    %v121 = vcosq.f32.pop %v119
    %v122 = vsinq.f32.pop %v119
    %vm123 = vweird.f32 %v28
    %v124 = vand.u32 %v120, 3
    %vm125 = vcmp.lt.s32.totalorder %v124, 2
    %vm126 = vcmp.eq.s32.totalorder %v124, 0
    %v127 = vxor.u32 %v122, 2147483648
    %v128 = vsel %vm126, %v121, %v127
    %vm129 = vcmp.eq.s32.totalorder %v124, 2
    %v130 = vxor.u32 %v121, 2147483648
    %v131 = vsel %vm129, %v130, %v122
    %v132 = vsel %vm125, %v128, %v131
    %v133 = vsel %vm123, nan, %v132
    %v134 = vand.u32 2147483647, %v28
    %vm135 = vcmp.le.f32.partialorder %v134, 0.7853982
    %vm136 = vcmp.lt.s32.totalorder %v28, 0
    %v137 = vand.u32 %v28, 2139095040
    %v138 = vshrl.u32 %v137, 23
    %v139 = vsub.s32 %v138, 127
    %v140 = vand.u32 2147483647, %v28
    %v141 = vand.u32 %v140, 8388607
    %v142 = vor.u32 %v141, 8388608
    %v143 = vsub.s32 0, %v142
    %v144 = vadd.s32 %v139, 1
    %vm145 = vcmp.gt.s32.totalorder %v144, 0
    %v146 = vsel %vm145, %v144, 0
    %v147 = vshrl.u32 %v146, 5
    %v148 = vand.u32 %v146, 31
    %v149 = vsub.s32 32, %v148
    %v150 = vshrl.u32 683565275, %v149
    %v151 = vshll.u32 683565275, %v148
    %v152 = vshrl.u32 2475754826, %v149
    %v153 = vor.u32 %v151, %v152
    %v154 = vshll.u32 2475754826, %v148
    %v155 = vshrl.u32 2131351028, %v149
    %v156 = vor.u32 %v154, %v155
    %v157 = vshll.u32 2131351028, %v148
    %v158 = vshrl.u32 2102212464, %v149
    %v159 = vor.u32 %v157, %v158
    %v160 = vshll.u32 2102212464, %v148
    %v161 = vshrl.u32 920167782, %v149
    %v162 = vor.u32 %v160, %v161
    %v163 = vshll.u32 920167782, %v148
    %v164 = vshrl.u32 1326507024, %v149
    %v165 = vor.u32 %v163, %v164
    %vm166 = vcmp.lt.s32.totalorder %v147, 1
    %vm167 = vcmp.lt.s32.totalorder %v147, 2
    %vm168 = vcmp.lt.s32.totalorder %v147, 3
    %vm169 = vcmp.lt.s32.totalorder %v147, 4
    %v170 = vsel %vm166, %v150, %v153
    %v171 = vsel %vm169, %v159, 2102212464
    %v172 = vsel %vm168, %v156, %v171
    %v173 = vsel %vm167, %v170, %v172
    %v174 = vsel %vm166, %v153, %v156
    %v175 = vsel %vm169, %v162, 920167782
    %v176 = vsel %vm168, %v159, %v175
    %v177 = vsel %vm167, %v174, %v176
    %v178 = vsel %vm166, %v156, %v159
    %v179 = vsel %vm169, %v165, 1326507024
    %v180 = vsel %vm168, %v162, %v179
    %v181 = vsel %vm167, %v178, %v180
    %v182 = vshll.u32 %v142, 8
    %v183 = vmul.u32.u64.compose %v182, %v181
    %v184 = vextract.low.u32 %v183
    %v185 = vextract.high.u32 %v183
    %v186 = vmul.u32.u64.compose %v182, %v177
    %v187 = vextract.low.u32 %v186
    %v188 = vextract.high.u32 %v186
    %v189 = vmul.u32 %v182, %v173
    %v190 = vadd.s32 %v185, %v187
    %vm191 = vc.u32 %v185, %v187
    %v192 = vadd.s32 %v188, 1
    %v193 = vsel %vm191, %v192, %v188
    %v194 = vadd.s32 %v189, %v193
    %v195 = vadd.s32 %v194, 536870912
    %v196 = vshrl.u32 %v195, 30
    %v197 = vshll.u32 %v196, 30
    %v198 = vsub.s32 %v194, %v197
    %vm199 = vcmp.lt.s32.totalorder %v198, 0
    %v200 = vsub.s32 0, %v198
    %v201 = vsel %vm199, %v200, %v198
    %v202 = vclz %v201
    %v203 = vsub.s32 %v202, 2
    %vm204 = vcmp.gt.s32.totalorder 0, %v203
    %v205 = vsel %vm204, 0, %v203
    %v206 = vsub.s32 32, %v205
    %v207 = vshll.u32 %v198, %v205
    %v208 = vshrl.u32 %v190, %v206
    %v209 = vor.u32 %v207, %v208
    %v210 = vsub.s32 4294967266, %v205
    %v211 = vadd.s32 %v210, 127
    %v212 = vshll.u32 %v211, 23
    %v213 = vor.u32 4788187, %v212
    %v214 = vand.u32 2147483647, %v213
    %v216 = vcvt.s32.f32 %v209
    %v217 = vmul.f32 %v216, %v214
    %v218 = vxor.u32 %v217, 2147483648
    %v219 = vsel %vm136, %v218, %v217
    %v220 = vsub.s32 4, %v196
    %v221 = vsel %vm136, %v220, %v196
    %v222 = vsel %vm135, %v28, %v219
    %v223 = vsel %vm135, 0, %v221
    %v224 = vcosq.f32.pop %v222
    %v225 = vsinq.f32.pop %v222
    %vm226 = vweird.f32 %v28
    %v227 = vadd.s32 %v223, 3
    %v228 = vand.u32 %v227, 3
    %vm229 = vcmp.lt.s32.totalorder %v228, 2
    %vm230 = vcmp.eq.s32.totalorder %v228, 0
    %v231 = vxor.u32 %v225, 2147483648
    %v232 = vsel %vm230, %v224, %v231
    %vm233 = vcmp.eq.s32.totalorder %v228, 2
    %v234 = vxor.u32 %v224, 2147483648
    %v235 = vsel %vm233, %v234, %v225
    %v236 = vsel %vm229, %v232, %v235
    %v237 = vsel %vm226, nan, %v236
    %v238 = vand.u32 2147483647, %v30
    %vm239 = vcmp.le.f32.partialorder %v238, 0.7853982
    %vm240 = vcmp.lt.s32.totalorder %v30, 0
    %v241 = vand.u32 %v30, 2139095040
    %v242 = vshrl.u32 %v241, 23
    %v243 = vsub.s32 %v242, 127
    %v244 = vand.u32 2147483647, %v30
    %v245 = vand.u32 %v244, 8388607
    %v246 = vor.u32 %v245, 8388608
    %v247 = vsub.s32 0, %v246
    %v248 = vadd.s32 %v243, 1
    %vm249 = vcmp.gt.s32.totalorder %v248, 0
    %v250 = vsel %vm249, %v248, 0
    %v251 = vshrl.u32 %v250, 5
    %v252 = vand.u32 %v250, 31
    %v253 = vsub.s32 32, %v252
    %v254 = vshrl.u32 683565275, %v253
    %v255 = vshll.u32 683565275, %v252
    %v256 = vshrl.u32 2475754826, %v253
    %v257 = vor.u32 %v255, %v256
    %v258 = vshll.u32 2475754826, %v252
    %v259 = vshrl.u32 2131351028, %v253
    %v260 = vor.u32 %v258, %v259
    %v261 = vshll.u32 2131351028, %v252
    %v262 = vshrl.u32 2102212464, %v253
    %v263 = vor.u32 %v261, %v262
    %v264 = vshll.u32 2102212464, %v252
    %v265 = vshrl.u32 920167782, %v253
    %v266 = vor.u32 %v264, %v265
    %v267 = vshll.u32 920167782, %v252
    %v268 = vshrl.u32 1326507024, %v253
    %v269 = vor.u32 %v267, %v268
    %vm270 = vcmp.lt.s32.totalorder %v251, 1
    %vm271 = vcmp.lt.s32.totalorder %v251, 2
    %vm272 = vcmp.lt.s32.totalorder %v251, 3
    %vm273 = vcmp.lt.s32.totalorder %v251, 4
    %v274 = vsel %vm270, %v254, %v257
    %v275 = vsel %vm273, %v263, 2102212464
    %v276 = vsel %vm272, %v260, %v275
    %v277 = vsel %vm271, %v274, %v276
    %v278 = vsel %vm270, %v257, %v260
    %v279 = vsel %vm273, %v266, 920167782
    %v280 = vsel %vm272, %v263, %v279
    %v281 = vsel %vm271, %v278, %v280
    %v282 = vsel %vm270, %v260, %v263
    %v283 = vsel %vm273, %v269, 1326507024
    %v284 = vsel %vm272, %v266, %v283
    %v285 = vsel %vm271, %v282, %v284
    %v286 = vshll.u32 %v246, 8
    %v287 = vmul.u32.u64.compose %v286, %v285
    %v288 = vextract.low.u32 %v287
    %v289 = vextract.high.u32 %v287
    %v290 = vmul.u32.u64.compose %v286, %v281
    %v291 = vextract.low.u32 %v290
    %v292 = vextract.high.u32 %v290
    %v293 = vmul.u32 %v286, %v277
    %v294 = vadd.s32 %v289, %v291
    %vm295 = vc.u32 %v289, %v291
    %v296 = vadd.s32 %v292, 1
    %v297 = vsel %vm295, %v296, %v292
    %v298 = vadd.s32 %v293, %v297
    %v299 = vadd.s32 %v298, 536870912
    %v300 = vshrl.u32 %v299, 30
    %v301 = vshll.u32 %v300, 30
    %v302 = vsub.s32 %v298, %v301
    %vm303 = vcmp.lt.s32.totalorder %v302, 0
    %v304 = vsub.s32 0, %v302
    %v305 = vsel %vm303, %v304, %v302
    %v306 = vclz %v305
    %v307 = vsub.s32 %v306, 2
    %vm308 = vcmp.gt.s32.totalorder 0, %v307
    %v309 = vsel %vm308, 0, %v307
    %v310 = vsub.s32 32, %v309
    %v311 = vshll.u32 %v302, %v309
    %v312 = vshrl.u32 %v294, %v310
    %v313 = vor.u32 %v311, %v312
    %v314 = vsub.s32 4294967266, %v309
    %v315 = vadd.s32 %v314, 127
    %v316 = vshll.u32 %v315, 23
    %v317 = vor.u32 4788187, %v316
    %v318 = vand.u32 2147483647, %v317
    %v320 = vcvt.s32.f32 %v313
    %v321 = vmul.f32 %v320, %v318
    %v322 = vxor.u32 %v321, 2147483648
    %v323 = vsel %vm240, %v322, %v321
    %v324 = vsub.s32 4, %v300
    %v325 = vsel %vm240, %v324, %v300
    %v326 = vsel %vm239, %v30, %v323
    %v327 = vsel %vm239, 0, %v325
    %v328 = vcosq.f32.pop %v326
    %v329 = vsinq.f32.pop %v326
    %vm330 = vweird.f32 %v30
    %v331 = vand.u32 %v327, 3
    %vm332 = vcmp.lt.s32.totalorder %v331, 2
    %vm333 = vcmp.eq.s32.totalorder %v331, 0
    %v334 = vxor.u32 %v329, 2147483648
    %v335 = vsel %vm333, %v328, %v334
    %vm336 = vcmp.eq.s32.totalorder %v331, 2
    %v337 = vxor.u32 %v328, 2147483648
    %v338 = vsel %vm336, %v337, %v329
    %v339 = vsel %vm332, %v335, %v338
    %v340 = vsel %vm330, nan, %v339
    %v341 = vand.u32 2147483647, %v30
    %vm342 = vcmp.le.f32.partialorder %v341, 0.7853982
    %vm343 = vcmp.lt.s32.totalorder %v30, 0
    %v344 = vand.u32 %v30, 2139095040
    %v345 = vshrl.u32 %v344, 23
    %v346 = vsub.s32 %v345, 127
    %v347 = vand.u32 2147483647, %v30
    %v348 = vand.u32 %v347, 8388607
    %v349 = vor.u32 %v348, 8388608
    %v350 = vsub.s32 0, %v349
    %v351 = vadd.s32 %v346, 1
    %vm352 = vcmp.gt.s32.totalorder %v351, 0
    %v353 = vsel %vm352, %v351, 0
    %v354 = vshrl.u32 %v353, 5
    %v355 = vand.u32 %v353, 31
    %v356 = vsub.s32 32, %v355
    %v357 = vshrl.u32 683565275, %v356
    %v358 = vshll.u32 683565275, %v355
    %v359 = vshrl.u32 2475754826, %v356
    %v360 = vor.u32 %v358, %v359
    %v361 = vshll.u32 2475754826, %v355
    %v362 = vshrl.u32 2131351028, %v356
    %v363 = vor.u32 %v361, %v362
    %v364 = vshll.u32 2131351028, %v355
    %v365 = vshrl.u32 2102212464, %v356
    %v366 = vor.u32 %v364, %v365
    %v367 = vshll.u32 2102212464, %v355
    %v368 = vshrl.u32 920167782, %v356
    %v369 = vor.u32 %v367, %v368
    %v370 = vshll.u32 920167782, %v355
    %v371 = vshrl.u32 1326507024, %v356
    %v372 = vor.u32 %v370, %v371
    %vm373 = vcmp.lt.s32.totalorder %v354, 1
    %vm374 = vcmp.lt.s32.totalorder %v354, 2
    %vm375 = vcmp.lt.s32.totalorder %v354, 3
    %vm376 = vcmp.lt.s32.totalorder %v354, 4
    %v377 = vsel %vm373, %v357, %v360
    %v378 = vsel %vm376, %v366, 2102212464
    %v379 = vsel %vm375, %v363, %v378
    %v380 = vsel %vm374, %v377, %v379
    %v381 = vsel %vm373, %v360, %v363
    %v382 = vsel %vm376, %v369, 920167782
    %v383 = vsel %vm375, %v366, %v382
    %v384 = vsel %vm374, %v381, %v383
    %v385 = vsel %vm373, %v363, %v366
    %v386 = vsel %vm376, %v372, 1326507024
    %v387 = vsel %vm375, %v369, %v386
    %v388 = vsel %vm374, %v385, %v387
    %v389 = vshll.u32 %v349, 8
    %v390 = vmul.u32.u64.compose %v389, %v388
    %v391 = vextract.low.u32 %v390
    %v392 = vextract.high.u32 %v390
    %v393 = vmul.u32.u64.compose %v389, %v384
    %v394 = vextract.low.u32 %v393
    %v395 = vextract.high.u32 %v393
    %v396 = vmul.u32 %v389, %v380
    %v397 = vadd.s32 %v392, %v394
    %vm398 = vc.u32 %v392, %v394
    %v399 = vadd.s32 %v395, 1
    %v400 = vsel %vm398, %v399, %v395
    %v401 = vadd.s32 %v396, %v400
    %v402 = vadd.s32 %v401, 536870912
    %v403 = vshrl.u32 %v402, 30
    %v404 = vshll.u32 %v403, 30
    %v405 = vsub.s32 %v401, %v404
    %vm406 = vcmp.lt.s32.totalorder %v405, 0
    %v407 = vsub.s32 0, %v405
    %v408 = vsel %vm406, %v407, %v405
    %v409 = vclz %v408
    %v410 = vsub.s32 %v409, 2
    %vm411 = vcmp.gt.s32.totalorder 0, %v410
    %v412 = vsel %vm411, 0, %v410
    %v413 = vsub.s32 32, %v412
    %v414 = vshll.u32 %v405, %v412
    %v415 = vshrl.u32 %v397, %v413
    %v416 = vor.u32 %v414, %v415
    %v417 = vsub.s32 4294967266, %v412
    %v418 = vadd.s32 %v417, 127
    %v419 = vshll.u32 %v418, 23
    %v420 = vor.u32 4788187, %v419
    %v421 = vand.u32 2147483647, %v420
    %v423 = vcvt.s32.f32 %v416
    %v424 = vmul.f32 %v423, %v421
    %v425 = vxor.u32 %v424, 2147483648
    %v426 = vsel %vm343, %v425, %v424
    %v427 = vsub.s32 4, %v403
    %v428 = vsel %vm343, %v427, %v403
    %v429 = vsel %vm342, %v30, %v426
    %v430 = vsel %vm342, 0, %v428
    %v431 = vcosq.f32.pop %v429
    %v432 = vsinq.f32.pop %v429
    %vm433 = vweird.f32 %v30
    %v434 = vadd.s32 %v430, 3
    %v435 = vand.u32 %v434, 3
    %vm436 = vcmp.lt.s32.totalorder %v435, 2
    %vm437 = vcmp.eq.s32.totalorder %v435, 0
    %v438 = vxor.u32 %v432, 2147483648
    %v439 = vsel %vm437, %v431, %v438
    %vm440 = vcmp.eq.s32.totalorder %v435, 2
    %v441 = vxor.u32 %v431, 2147483648
    %v442 = vsel %vm440, %v441, %v432
    %v443 = vsel %vm436, %v439, %v442
    %v444 = vsel %vm433, nan, %v443
    %s445 = sld [smem:[#allocation3]]
    %s446 = sld [smem:[#allocation3 + $0x3]]
    %v447 = vstv %s446
    %v448 = vmul.f32 %v447, %v340
    %v449 = vstv %s445
    %v450 = vadd.f32 %v449, %v448
    %s451 = sld [smem:[#allocation3 + $0x4]]
    %v452 = vstv %s451
    %v453 = vmul.f32 %v452, %v444
    %v454 = vadd.f32 %v450, %v453
    %s455 = sld [smem:[#allocation3 + $0x1]]
    %s456 = sld [smem:[#allocation3 + $0x5]]
    %v457 = vstv %s456
    %v458 = vmul.f32 %v457, %v340
    %v459 = vstv %s455
    %v460 = vadd.f32 %v459, %v458
    %s461 = sld [smem:[#allocation3 + $0x6]]
    %v462 = vstv %s461
    %v463 = vmul.f32 %v462, %v444
    %v464 = vadd.f32 %v460, %v463
    %s465 = sld [smem:[#allocation3 + $0x2]]
    %s466 = sld [smem:[#allocation3 + $0x7]]
    %v467 = vstv %s466
    %v468 = vmul.f32 %v467, %v340
    %v469 = vstv %s465
    %v470 = vadd.f32 %v469, %v468
    %s471 = sld [smem:[#allocation3 + $0x8]]
    %v472 = vstv %s471
    %v473 = vmul.f32 %v472, %v444
    %v474 = vadd.f32 %v470, %v473
    %v475 = vmul.f32 %v133, %v464
    %v476 = vadd.f32 %v454, %v475
    %v477 = vmul.f32 %v237, %v474
    %v478 = vadd.f32 %v476, %v477
    %v479 = vmul.f32 %v478, 0.5
    %v480 = vtanh.pop %v479
    %v481 = vmul.f32 %v480, 0.5
    %v482 = vadd.f32 %v481, 0.5
    %483 = vst [vmem:[#allocation7] sm:$0xff] %v482
    // Predicated region
    $region10: #{tpu_custom_call.1} parent=1 // pred_check
      _
    $region11: #{tpu_custom_call.1} parent=1 // pred_check_branch
      %485 = sbr.rel (0) target = $region13
    $region12: #{tpu_custom_call.1} parent=1 // pred_region
      %s487 = ssub.s32 128, 128
      %488 = vsyncadd [#allocation6], %s487
      %s490 = sshll.u32 [#allocation7], 4
      %s491 = int_to_ptr.vmem [resolvable:$true] %s490
      %493 = dma.vmem_to_hbm [thread:$0]  %s491, 128, %s2, [#allocation6]
    $region13: #{tpu_custom_call.1} parent=1 // pred_fallthru
      _
    // Predicated region
    $region14: #{tpu_custom_call.1} parent=1 // pred_check
      _
    $region15: #{tpu_custom_call.1} parent=1 // pred_check_branch
      %495 = sbr.rel (0) target = $region17
    $region16: #{tpu_custom_call.1} parent=1 // pred_region
      %496 = dma.done [#allocation6], 128
    $region17: #{tpu_custom_call.1} parent=1 // pred_fallthru
      _
    %497 = vsyncpa [#allocation5], 1
    %498 = vsyncpa [#allocation6], 1

</llo_original>
